<compile_context>
chip_gen: v5e
topology: v5e:2x2
jax: 0.10.0
libtpu: 0.0.40
codegen_flags: <defaults>
</compile_context>

<pallas_src>
import numpy as np
import jax
import jax.numpy as jnp
from jax.experimental import pallas as pl
from jax.experimental.pallas import tpu as pltpu


def _round_up(n, m):
    return ((n + m - 1) // m) * m


def _embedding_kernel(x_ref, xcat_ref, p_cont_ref, e_big_ref, out_ref):
    # x_ref:      (TB, input_dim)        float32 (raw inputs; cat cols hold codes)
    # xcat_ref:   (TB, n_cat)            int32   (cat codes with vocab offsets added)
    # p_cont_ref: (input_dim, post_pad)  float32 (0/1 continuous-column routing)
    # e_big_ref:  (vocab_pad, post_pad)  bfloat16 (all embedding tables, placed)
    # out_ref:    (TB, post_pad)         float32
    x = x_ref[...]
    codes = xcat_ref[...]
    tb = x.shape[0]
    v = e_big_ref.shape[0]
    n_cat = codes.shape[1]

    # Summed one-hot H[b, v]: vocab ranges are disjoint, so a plain sum of the
    # per-category one-hots is exact. Small static loop (n_cat iterations).
    iota = jax.lax.broadcasted_iota(jnp.int32, (tb, v), 1)
    h = jnp.zeros((tb, v), jnp.float32)
    for j in range(n_cat):
        h = h + (codes[:, j:j + 1] == iota).astype(jnp.float32)
    h = h.astype(jnp.bfloat16)  # 0/1 values: exact in bf16

    # Continuous passthrough: exact f32 selection matmul (tiny K, MXU is idle).
    out = jnp.dot(x, p_cont_ref[...], preferred_element_type=jnp.float32)
    # Embedding lookup: bf16 one-hot x bf16 tables, f32 accumulation.
    out = out + jnp.dot(h, e_big_ref[...], preferred_element_type=jnp.float32)
    out_ref[...] = out


def embedding_generator_forward(x, xcat_offset, p_cont, e_big, post_embed_dim,
                                block_b=256):
    """Batch-tiled Pallas forward. Returns (B, post_embed_dim) float32."""
    b, input_dim = x.shape
    n_cat = xcat_offset.shape[1]
    vocab_pad, post_pad = e_big.shape

    tb = min(block_b, _round_up(b, 8))
    b_pad = _round_up(b, tb)
    if b_pad != b:
        x = jnp.pad(x, ((0, b_pad - b), (0, 0)))
        xcat_offset = jnp.pad(xcat_offset, ((0, b_pad - b), (0, 0)))
    grid = (b_pad // tb,)

    cost = pl.CostEstimate(
        flops=int(2 * b_pad * (input_dim + vocab_pad) * post_pad),
        transcendentals=0,
        bytes_accessed=int(x.size * 4 + xcat_offset.size * 4 + p_cont.size * 4
                           + e_big.size * 2 + b_pad * post_pad * 4),
    )

    out = pl.pallas_call(
        _embedding_kernel,
        out_shape=jax.ShapeDtypeStruct((b_pad, post_pad), jnp.float32),
        grid=grid,
        in_specs=[
            pl.BlockSpec((tb, input_dim), lambda i: (i, 0)),
            pl.BlockSpec((tb, n_cat), lambda i: (i, 0)),
            # Grid-invariant weights: constant (0, 0) index map keeps them
            # VMEM-resident (no re-DMA across batch tiles). For very large
            # tables on v7x (64 MiB VMEM), add pipeline_mode=pl.Buffered(1)
            # here to drop the redundant second buffer.
            pl.BlockSpec((input_dim, post_pad), lambda i: (0, 0)),
            pl.BlockSpec((vocab_pad, post_pad), lambda i: (0, 0)),
        ],
        out_specs=pl.BlockSpec((tb, post_pad), lambda i: (i, 0)),
        compiler_params=pltpu.CompilerParams(
            dimension_semantics=("parallel",)),
        cost_estimate=cost,
    )(x, xcat_offset, p_cont, e_big)

    # Slice off batch padding and the lane-padding columns.
    return out[:b, :post_embed_dim]


def build_embedding_generator(input_dim, cat_dims, cat_idxs, cat_emb_dims,
                              group_matrix, key):
    """Glue: deterministic parameter init + static routing matrices (padded)."""
    post_embed_dim = int(input_dim + np.sum(cat_emb_dims) - len(cat_emb_dims))
    post_pad = _round_up(post_embed_dim, 128)        # lane-dense output columns
    total_vocab = int(np.sum(cat_dims))
    vocab_pad = _round_up(total_vocab, 8)            # sublane-friendly K

    continuous = np.ones(input_dim, dtype=bool)
    continuous[np.asarray(cat_idxs)] = False

    # Embedding tables (torch.nn.Embedding default init ~ N(0, 1)).
    # Stored/applied in bf16; quantize once so kernel and reference agree.
    keys = jax.random.split(key, len(cat_dims))
    emb_tables = []
    for k, cd, ed in zip(keys, cat_dims, cat_emb_dims):
        t = jax.random.normal(k, (cd, ed), dtype=jnp.float32)
        t = t.astype(jnp.bfloat16).astype(jnp.float32)
        emb_tables.append(t)

    vocab_offsets = np.concatenate([[0], np.cumsum(cat_dims)[:-1]]).astype(np.int32)

    p_cont = np.zeros((input_dim, post_pad), np.float32)
    e_big = np.zeros((vocab_pad, post_pad), np.float32)

    # embedding_group_matrix as built in __init__ (unused by forward).
    n_groups = group_matrix.shape[0]
    emb_group_matrix = np.empty((n_groups, post_embed_dim), np.float32)

    post = 0
    cat_counter = 0
    for feat in range(input_dim):
        if continuous[feat]:
            p_cont[feat, post] = 1.0
            emb_group_matrix[:, post] = group_matrix[:, feat]
            post += 1
        else:
            cd = cat_dims[cat_counter]
            ed = cat_emb_dims[cat_counter]
            off = vocab_offsets[cat_counter]
            e_big[off:off + cd, post:post + ed] = np.asarray(emb_tables[cat_counter])
            emb_group_matrix[:, post:post + ed] = (
                group_matrix[:, feat:feat + 1] / ed)
            post += ed
            cat_counter += 1

    params = dict(
        p_cont=jnp.asarray(p_cont, jnp.float32),
        e_big=jnp.asarray(e_big, jnp.bfloat16),       # exact cast (pre-quantized)
        vocab_offsets=jnp.asarray(vocab_offsets),
        cat_idxs=np.asarray(cat_idxs, np.int32),
        emb_tables=emb_tables,
        continuous=continuous,
        post_embed_dim=post_embed_dim,
        post_pad=post_pad,
        embedding_group_matrix=jnp.asarray(emb_group_matrix),
    )
    return params


def reference_forward(x, params):
    """Pure-JAX reference mirroring the PyTorch loop (for validation)."""
    cols = []
    cat_counter = 0
    for feat in range(x.shape[1]):
        if params["continuous"][feat]:
            cols.append(x[:, feat:feat + 1].astype(jnp.float32))
        else:
            idx = x[:, feat].astype(jnp.int32)
            cols.append(params["emb_tables"][cat_counter][idx])
            cat_counter += 1
    return jnp.concatenate(cols, axis=1)


if __name__ == "__main__":
    key = jax.random.PRNGKey(0)
    k_params, k_cont, k_cat = jax.random.split(key, 3)

    # Small but non-trivial: batch is NOT a multiple of the tile, so the
    # wrapper's batch padding AND the multi-step (grid=(3,)) pipeline are both
    # exercised.
    batch = 300
    input_dim = 16
    cat_idxs = [1, 5, 9, 13]
    cat_dims = [7, 5, 11, 3]
    cat_emb_dims = [4, 3, 2, 5]
    n_groups = 3
    group_matrix = np.full((n_groups, input_dim), 1.0 / input_dim, np.float32)

    params = build_embedding_generator(
        input_dim, cat_dims, cat_idxs, cat_emb_dims, group_matrix, k_params)

    # Build input: continuous columns ~ N(0,1); categorical columns hold
    # integer codes (stored as float, as in the PyTorch usage).
    x = jax.random.normal(k_cont, (batch, input_dim), dtype=jnp.float32)
    codes = []
    ks = jax.random.split(k_cat, len(cat_dims))
    for k_i, cd in zip(ks, cat_dims):
        codes.append(jax.random.randint(k_i, (batch,), 0, cd))
    codes = jnp.stack(codes, axis=1)  # (batch, n_cat)
    x = x.at[:, jnp.asarray(cat_idxs)].set(codes.astype(jnp.float32))

    # Kernel inputs: raw float x, and cat codes with vocab offsets added.
    # NOTE: out-of-range / negative codes would silently produce a zero row
    # here (PyTorch nn.Embedding would raise); clamp upstream if needed.
    xcat_offset = (codes + params["vocab_offsets"][None, :]).astype(jnp.int32)

    out = embedding_generator_forward(
        x, xcat_offset, params["p_cont"], params["e_big"],
        params["post_embed_dim"], block_b=128)
    out = jax.block_until_ready(out)

    ref = reference_forward(x, params)
    np.testing.assert_allclose(np.asarray(out), np.asarray(ref),
                               rtol=1e-5, atol=1e-5)
    assert out.shape == (batch, params["post_embed_dim"])

    print("KERNEL_OK")
</pallas_src>

<mosaic_0001>
module attributes {stable_mosaic.version = 11 : i64} {
  func.func @_embedding_kernel(%arg0: i32, %arg1: memref<128x16xf32, #tpu.memory_space<vmem>>, %arg2: memref<128x4xi32, #tpu.memory_space<vmem>>, %arg3: memref<16x128xf32, #tpu.memory_space<vmem>>, %arg4: memref<32x128xbf16, #tpu.memory_space<vmem>>, %arg5: memref<128x128xf32, #tpu.memory_space<vmem>>) attributes {dimension_semantics = [#tpu.dimension_semantics<parallel>], iteration_bounds = array<i64: 3>, scalar_prefetch = 0 : i64, scratch_operands = 0 : i64, tpu.core_type = #tpu.core_type<tc>, window_params = [{transform_indices = @transform_0, window_bounds = array<i64: 128, 16>}, {transform_indices = @transform_1, window_bounds = array<i64: 128, 4>}, {pipeline_mode = #tpu.pipeline_mode<synchronous>, transform_indices = @transform_2, window_bounds = array<i64: 16, 128>}, {pipeline_mode = #tpu.pipeline_mode<synchronous>, transform_indices = @transform_3, window_bounds = array<i64: 32, 128>}, {transform_indices = @transform_4, window_bounds = array<i64: 128, 128>}]} {
    %c0 = arith.constant 0 : index
    %c0_0 = arith.constant 0 : index
    %0 = vector.load %arg1[%c0, %c0_0] : memref<128x16xf32, #tpu.memory_space<vmem>>, vector<128x16xf32>
    %c0_1 = arith.constant 0 : index
    %c0_2 = arith.constant 0 : index
    %1 = vector.load %arg2[%c0_1, %c0_2] : memref<128x4xi32, #tpu.memory_space<vmem>>, vector<128x4xi32>
    %2 = tpu.iota {dimensions = array<i32: 1>} : vector<128x32xi32>
    %cst = arith.constant 0.000000e+00 : f32
    %3 = vector.broadcast %cst : f32 to vector<128x32xf32>
    %4 = vector.extract_strided_slice %1 {offsets = [0, 0], sizes = [128, 1], strides = [1, 1]} : vector<128x4xi32> to vector<128x1xi32>
    %5 = vector.broadcast %4 : vector<128x1xi32> to vector<128x32xi32>
    %6 = arith.cmpi eq, %5, %2 : vector<128x32xi32>
    %7 = arith.extui %6 : vector<128x32xi1> to vector<128x32xi32>
    %8 = arith.sitofp %7 : vector<128x32xi32> to vector<128x32xf32>
    %9 = arith.addf %3, %8 : vector<128x32xf32>
    %10 = vector.extract_strided_slice %1 {offsets = [0, 1], sizes = [128, 1], strides = [1, 1]} : vector<128x4xi32> to vector<128x1xi32>
    %11 = vector.broadcast %10 : vector<128x1xi32> to vector<128x32xi32>
    %12 = arith.cmpi eq, %11, %2 : vector<128x32xi32>
    %13 = arith.extui %12 : vector<128x32xi1> to vector<128x32xi32>
    %14 = arith.sitofp %13 : vector<128x32xi32> to vector<128x32xf32>
    %15 = arith.addf %9, %14 : vector<128x32xf32>
    %16 = vector.extract_strided_slice %1 {offsets = [0, 2], sizes = [128, 1], strides = [1, 1]} : vector<128x4xi32> to vector<128x1xi32>
    %17 = vector.broadcast %16 : vector<128x1xi32> to vector<128x32xi32>
    %18 = arith.cmpi eq, %17, %2 : vector<128x32xi32>
    %19 = arith.extui %18 : vector<128x32xi1> to vector<128x32xi32>
    %20 = arith.sitofp %19 : vector<128x32xi32> to vector<128x32xf32>
    %21 = arith.addf %15, %20 : vector<128x32xf32>
    %22 = vector.extract_strided_slice %1 {offsets = [0, 3], sizes = [128, 1], strides = [1, 1]} : vector<128x4xi32> to vector<128x1xi32>
    %23 = vector.broadcast %22 : vector<128x1xi32> to vector<128x32xi32>
    %24 = arith.cmpi eq, %23, %2 : vector<128x32xi32>
    %25 = arith.extui %24 : vector<128x32xi1> to vector<128x32xi32>
    %26 = arith.sitofp %25 : vector<128x32xi32> to vector<128x32xf32>
    %27 = arith.addf %21, %26 : vector<128x32xf32>
    %28 = arith.truncf %27 : vector<128x32xf32> to vector<128x32xbf16>
    %c0_3 = arith.constant 0 : index
    %c0_4 = arith.constant 0 : index
    %29 = vector.load %arg3[%c0_3, %c0_4] : memref<16x128xf32, #tpu.memory_space<vmem>>, vector<16x128xf32>
    %cst_5 = arith.constant dense<0.000000e+00> : vector<128x128xf32>
    %30 = tpu.matmul %0, %29, %cst_5 {dimension_numbers = #tpu.dot_dimension_numbers<[1], [0], [0], [1], [0, 0, 1, 1], [], []>} : vector<128x16xf32>, vector<16x128xf32>, vector<128x128xf32> -> vector<128x128xf32>
    %c0_6 = arith.constant 0 : index
    %c0_7 = arith.constant 0 : index
    %31 = vector.load %arg4[%c0_6, %c0_7] : memref<32x128xbf16, #tpu.memory_space<vmem>>, vector<32x128xbf16>
    %cst_8 = arith.constant dense<0.000000e+00> : vector<128x128xf32>
    %32 = tpu.matmul %28, %31, %cst_8 {dimension_numbers = #tpu.dot_dimension_numbers<[1], [0], [0], [1], [0, 0, 1, 1], [], []>} : vector<128x32xbf16>, vector<32x128xbf16>, vector<128x128xf32> -> vector<128x128xf32>
    %33 = arith.addf %30, %32 : vector<128x128xf32>
    %c0_9 = arith.constant 0 : index
    %c0_10 = arith.constant 0 : index
    %34 = vector.load %arg5[%c0_9, %c0_10] : memref<128x128xf32, #tpu.memory_space<vmem>>, vector<128x128xf32>
    tpu.vector_store %arg5[%c0_9, %c0_10], %33 {strides = array<i32>} : memref<128x128xf32, #tpu.memory_space<vmem>>, vector<128x128xf32>,
    return
  }
  func.func @transform_0(%arg0: i32) -> (i32, i32) {
    %c0_i32 = arith.constant 0 : i32
    %c0_i32_0 = arith.constant 0 : i32
    return %arg0, %c0_i32 : i32, i32
  }
  func.func @transform_1(%arg0: i32) -> (i32, i32) {
    %c0_i32 = arith.constant 0 : i32
    %c0_i32_0 = arith.constant 0 : i32
    return %arg0, %c0_i32 : i32, i32
  }
  func.func @transform_2(%arg0: i32) -> (i32, i32) {
    %c0_i32 = arith.constant 0 : i32
    %c0_i32_0 = arith.constant 0 : i32
    %c0_i32_1 = arith.constant 0 : i32
    return %c0_i32, %c0_i32_0 : i32, i32
  }
  func.func @transform_3(%arg0: i32) -> (i32, i32) {
    %c0_i32 = arith.constant 0 : i32
    %c0_i32_0 = arith.constant 0 : i32
    %c0_i32_1 = arith.constant 0 : i32
    return %c0_i32, %c0_i32_0 : i32, i32
  }
  func.func @transform_4(%arg0: i32) -> (i32, i32) {
    %c0_i32 = arith.constant 0 : i32
    %c0_i32_0 = arith.constant 0 : i32
    return %arg0, %c0_i32 : i32, i32
  }
}

</mosaic_0001>

<llo_original>
// kernel: tpu_custom_call.1
$region0: #{tpu_custom_call.1}
  #allocation0 [shape = 'u32[]', space=smem, size = 0x4, offset = 0x4, fixed_abs, tag = 'smem constant byte address 0x4 - core index']
  #allocation1 [shape = 'u32[72,128]{1,0:T(1,128)}', space=vmem, size = 0x9000, scoped, tag = 'internal scratch']
  %s0 = inlined_call_operand.vmem [shape: f32[384,16], index: 0, kind: input, shape index: {}]
  %s1 = inlined_call_operand.vmem [shape: s32[384,4], index: 1, kind: input, shape index: {}]
  %s2 = inlined_call_operand.vmem [shape: f32[16,128], index: 2, kind: input, shape index: {}]
  %s3 = inlined_call_operand.vmem [shape: bf16[32,128], index: 3, kind: input, shape index: {}]
  %s4 = inlined_call_operand.hbm [shape: f32[384,128], index: 4, kind: output, shape index: {}]
  %s5 = sld [smem:[#allocation0]]
  $region49: #{tpu_custom_call.1} parent=0
    _
  %s7 = ssub.s32 1, %s5
  %s8 = scalar_select 0, %s7, %s5
  $region1: #{tpu_custom_call.1} parent=0
    #allocation2 [shape = 'u8[131072]{0}', space=vmem, size = 0x20000, scoped, tag = 'output window, operand 0']
    #allocation3 [shape = 's32[2]{0}', space=sflag, size = 0x8, scoped, tag = 'scoped memory for tpu_custom_call.1']
    %9 = vsyncpa [#allocation3], 0
    %s10 = scalar_lea.sflag [#allocation3], 1
    %11 = vsyncpa %s10, 0
    loop: start=0, step=1, limit=5
    $region2: #{tpu_custom_call.1} parent=1 // loop_pre_header
      _
    $region3: #{tpu_custom_call.1} parent=1 // loop_header
      %s13 = sphi 0, %s17
      %p14 = scmp.ge.s32.totalorder %s13, 5
      %s23 = sphi 0, %s25
      %s26 = sphi 0, %s23
      %s27 = sphi 0, %s26
      %s43 = sphi 0, %s27
      %s49 = sphi 0, %s51
      %s52 = sphi 0, %s49
      %s53 = sphi 0, %s52
      %s69 = sphi 0, %s53
      %s73 = sphi 0, %s73
      %s75 = sphi 0, %s73
      %s76 = sphi 0, %s75
      %s90 = sphi 0, %s76
      %s94 = sphi 0, %s94
      %s96 = sphi 0, %s94
      %s97 = sphi 0, %s96
      %s111 = sphi 0, %s97
      %s117 = sphi 0, %s119
      %s120 = sphi 0, %s117
      %s121 = sphi 0, %s120
      %s137 = sphi 0, %s121
    $region4: #{tpu_custom_call.1} parent=1 // loop_header_branch
      %16 = sbr.rel (%p14) target = $region8
    $region5: #{tpu_custom_call.1} parent=1 // loop_body
      %s18 = ssub.s32 %s13, 1
      %s19 = ssub.s32 %s13, 2
      %s20 = sadd.s32 %s13, 1
      %s21 = ssub.s32 %s13, %s20
      %p22 = scmp.eq.s32.totalorder %s21, 0
      %s24 = sadd.s32 %s23, 1
      %s25 = scalar_select %p22, %s23, %s24
      %p28 = pneg %p22
      %p29 = scmp.eq.s32.totalorder %s13, 2
      %p30 = por %p28, %p29
      %p31 = scmp.ne.s32.totalorder %s23, %s26
      %p32 = scmp.eq.s32.totalorder %s13, 0
      %p33 = por %p31, %p32
      %p34 = scmp.ne.s32.totalorder %s23, %s26
      %p35 = scmp.eq.s32.totalorder %s18, 2
      %p36 = por %p34, %p35
      %p37 = scmp.ne.s32.totalorder %s26, %s27
      %p38 = scmp.eq.s32.totalorder %s18, 0
      %p39 = por %p37, %p38
      %p40 = scmp.ne.s32.totalorder %s26, %s27
      %p41 = scmp.eq.s32.totalorder %s19, 2
      %p42 = por %p40, %p41
      %p44 = scmp.ne.s32.totalorder %s27, %s43
      %p45 = scmp.eq.s32.totalorder %s19, 0
      %p46 = por %p44, %p45
      %s47 = ssub.s32 %s13, %s20
      %p48 = scmp.eq.s32.totalorder %s47, 0
      %s50 = sadd.s32 %s49, 1
      %s51 = scalar_select %p48, %s49, %s50
      %p54 = pneg %p48
      %p55 = scmp.eq.s32.totalorder %s13, 2
      %p56 = por %p54, %p55
      %p57 = scmp.ne.s32.totalorder %s49, %s52
      %p58 = scmp.eq.s32.totalorder %s13, 0
      %p59 = por %p57, %p58
      %p60 = scmp.ne.s32.totalorder %s49, %s52
      %p61 = scmp.eq.s32.totalorder %s18, 2
      %p62 = por %p60, %p61
      %p63 = scmp.ne.s32.totalorder %s52, %s53
      %p64 = scmp.eq.s32.totalorder %s18, 0
      %p65 = por %p63, %p64
      %p66 = scmp.ne.s32.totalorder %s52, %s53
      %p67 = scmp.eq.s32.totalorder %s19, 2
      %p68 = por %p66, %p67
      %p70 = scmp.ne.s32.totalorder %s53, %s69
      %p71 = scmp.eq.s32.totalorder %s19, 0
      %p72 = por %p70, %p71
      %s74 = sadd.s32 %s73, 1
      %p77 = scmp.eq.s32.totalorder %s13, 2
      %p78 = scmp.ne.s32.totalorder %s73, %s75
      %p79 = scmp.eq.s32.totalorder %s13, 0
      %p80 = por %p78, %p79
      %p81 = scmp.ne.s32.totalorder %s73, %s75
      %p82 = scmp.eq.s32.totalorder %s18, 2
      %p83 = por %p81, %p82
      %p84 = scmp.ne.s32.totalorder %s75, %s76
      %p85 = scmp.eq.s32.totalorder %s18, 0
      %p86 = por %p84, %p85
      %p87 = scmp.ne.s32.totalorder %s75, %s76
      %p88 = scmp.eq.s32.totalorder %s19, 2
      %p89 = por %p87, %p88
      %p91 = scmp.ne.s32.totalorder %s76, %s90
      %p92 = scmp.eq.s32.totalorder %s19, 0
      %p93 = por %p91, %p92
      %s95 = sadd.s32 %s94, 1
      %p98 = scmp.eq.s32.totalorder %s13, 2
      %p99 = scmp.ne.s32.totalorder %s94, %s96
      %p100 = scmp.eq.s32.totalorder %s13, 0
      %p101 = por %p99, %p100
      %p102 = scmp.ne.s32.totalorder %s94, %s96
      %p103 = scmp.eq.s32.totalorder %s18, 2
      %p104 = por %p102, %p103
      %p105 = scmp.ne.s32.totalorder %s96, %s97
      %p106 = scmp.eq.s32.totalorder %s18, 0
      %p107 = por %p105, %p106
      %p108 = scmp.ne.s32.totalorder %s96, %s97
      %p109 = scmp.eq.s32.totalorder %s19, 2
      %p110 = por %p108, %p109
      %p112 = scmp.ne.s32.totalorder %s97, %s111
      %p113 = scmp.eq.s32.totalorder %s19, 0
      %p114 = por %p112, %p113
      %s115 = ssub.s32 %s13, %s20
      %p116 = scmp.eq.s32.totalorder %s115, 0
      %s118 = sadd.s32 %s117, 1
      %s119 = scalar_select %p116, %s117, %s118
      %p122 = pneg %p116
      %p123 = scmp.eq.s32.totalorder %s13, 2
      %p124 = por %p122, %p123
      %p125 = scmp.ne.s32.totalorder %s117, %s120
      %p126 = scmp.eq.s32.totalorder %s13, 0
      %p127 = por %p125, %p126
      %p128 = scmp.ne.s32.totalorder %s117, %s120
      %p129 = scmp.eq.s32.totalorder %s18, 2
      %p130 = por %p128, %p129
      %p131 = scmp.ne.s32.totalorder %s120, %s121
      %p132 = scmp.eq.s32.totalorder %s18, 0
      %p133 = por %p131, %p132
      %p134 = scmp.ne.s32.totalorder %s120, %s121
      %p135 = scmp.eq.s32.totalorder %s19, 2
      %p136 = por %p134, %p135
      %p138 = scmp.ne.s32.totalorder %s121, %s137
      %p139 = scmp.eq.s32.totalorder %s19, 0
      %p140 = por %p138, %p139
      %p141 = scmp.le.s32.totalorder 1, %s13
      %p142 = scmp.lt.s32.totalorder %s13, 4
      %p143 = pnand %p141, %p142
      %p144 = pneg %p143
      // Predicated region
      $region9: #{tpu_custom_call.1} parent=5 // pred_check
        _
      $region10: #{tpu_custom_call.1} parent=5 // pred_check_branch
        %146 = sbr.rel (%p143) target = $region12
      $region11: #{tpu_custom_call.1} parent=5 // pred_region
        %s147 = ssub.s32 %s13, 1
        // Predicated region
        $region13: #{tpu_custom_call.1} parent=11 // pred_check
          %p148 = pneg %p86
        $region14: #{tpu_custom_call.1} parent=11 // pred_check_branch
          %150 = sbr.rel (%p148) target = $region16
        $region15: #{tpu_custom_call.1} parent=11 // pred_region
          _
        $region16: #{tpu_custom_call.1} parent=11 // pred_fallthru
          _
        // Predicated region
        $region17: #{tpu_custom_call.1} parent=11 // pred_check
          %p151 = pneg %p107
        $region18: #{tpu_custom_call.1} parent=11 // pred_check_branch
          %153 = sbr.rel (%p151) target = $region20
        $region19: #{tpu_custom_call.1} parent=11 // pred_region
          _
        $region20: #{tpu_custom_call.1} parent=11 // pred_fallthru
          _
      $region12: #{tpu_custom_call.1} parent=5 // pred_fallthru
        _
      %p154 = scmp.lt.s32.totalorder %s13, 3
      // Predicated region
      $region21: #{tpu_custom_call.1} parent=5 // pred_check
        %p155 = pneg %p154
      $region22: #{tpu_custom_call.1} parent=5 // pred_check_branch
        %157 = sbr.rel (%p155) target = $region24
      $region23: #{tpu_custom_call.1} parent=5 // pred_region
        // Predicated region
        $region25: #{tpu_custom_call.1} parent=23 // pred_check
          %p158 = pneg %p33
        $region26: #{tpu_custom_call.1} parent=23 // pred_check_branch
          %160 = sbr.rel (%p158) target = $region28
        $region27: #{tpu_custom_call.1} parent=23 // pred_region
          %s161 = smul.u32 16, %s13
          %p162 = scmp.lt.s32.totalorder %s161, 47
          %s163 = scalar_select %p162, %s161, 47
          %s164 = smul.addr %s163, 8
          %s165 = scalar_lea.vmem %s0, %s164
          %s166 = smul.u32 16, %s13
        $region28: #{tpu_custom_call.1} parent=23 // pred_fallthru
          _
        // Predicated region
        $region29: #{tpu_custom_call.1} parent=23 // pred_check
          %p167 = pneg %p59
        $region30: #{tpu_custom_call.1} parent=23 // pred_check_branch
          %169 = sbr.rel (%p167) target = $region32
        $region31: #{tpu_custom_call.1} parent=23 // pred_region
          %s170 = smul.u32 16, %s13
          %p171 = scmp.lt.s32.totalorder %s170, 47
          %s172 = scalar_select %p171, %s170, 47
          %s173 = smul.addr %s172, 8
          %s174 = scalar_lea.vmem %s1, %s173
          %s175 = smul.u32 16, %s13
        $region32: #{tpu_custom_call.1} parent=23 // pred_fallthru
          _
      $region24: #{tpu_custom_call.1} parent=5 // pred_fallthru
        _
      %p176 = scmp.le.s32.totalorder 1, %s13
      %p177 = scmp.lt.s32.totalorder %s13, 4
      %p178 = pnand %p176, %p177
      %p179 = pneg %p178
      // Predicated region
      $region33: #{tpu_custom_call.1} parent=5 // pred_check
        _
      $region34: #{tpu_custom_call.1} parent=5 // pred_check_branch
        %181 = sbr.rel (%p178) target = $region36
      $region35: #{tpu_custom_call.1} parent=5 // pred_region
        %s182 = ssub.s32 %s13, 1
        %s183 = smul.u32 16, %s18
        %p184 = scmp.lt.s32.totalorder %s183, 47
        %s185 = scalar_select %p184, %s183, 47
        %s186 = smul.addr %s185, 8
        %s187 = scalar_lea.vmem %s0, %s186
        %p188 = pneg %p39
        %p189 = pneg %p36
        %s190 = smul.u32 16, %s18
        %p191 = scmp.lt.s32.totalorder %s190, 47
        %s192 = scalar_select %p191, %s190, 47
        %s193 = smul.addr %s192, 8
        %s194 = scalar_lea.vmem %s1, %s193
        %p195 = pneg %p65
        %p196 = pneg %p62
        %p197 = pneg %p86
        %p198 = pneg %p83
        %p199 = pneg %p107
        %p200 = pneg %p104
        %p201 = pneg %p133
        %p202 = pneg %p130
        %s203 = sand.u32 %s120, 1
        %s204 = scalar_lea.sflag [#allocation3], %s203
        %s205 = sand.u32 %s120, 1
        %s206 = smul.addr %s205, 128
        %s207 = scalar_lea.vmem [#allocation2], %s206
        %s208 = smul.u32 16, %s18
        %p209 = scmp.lt.s32.totalorder %s208, 47
        %s210 = scalar_select %p209, %s208, 47
        %s211 = smul.addr %s210, 8
        %s212 = scalar_lea.vmem %s0, %s211
        %s213 = smul.u32 16, %s18
        %s214 = smul.u32 16, %s18
        %p215 = scmp.lt.s32.totalorder %s214, 47
        %s216 = scalar_select %p215, %s214, 47
        %s217 = smul.addr %s216, 8
        %s218 = scalar_lea.vmem %s1, %s217
        %s219 = smul.u32 16, %s18
        %s220 = smul.u32 16, %s18
        %v222 = vld [vmem:[%s212] sm:$0xff]
        %v223 = vld [vmem:[%s212 + $0x8] sm:$0xff]
        %v224 = vld [vmem:[%s212 + $0x10] sm:$0xff]
        %v225 = vld [vmem:[%s212 + $0x18] sm:$0xff]
        %v226 = vld [vmem:[%s212 + $0x20] sm:$0xff]
        %v227 = vld [vmem:[%s212 + $0x28] sm:$0xff]
        %v228 = vld [vmem:[%s212 + $0x30] sm:$0xff]
        %v229 = vld [vmem:[%s212 + $0x38] sm:$0xff]
        %v230 = vld [vmem:[%s212 + $0x40] sm:$0xff]
        %v231 = vld [vmem:[%s212 + $0x48] sm:$0xff]
        %v232 = vld [vmem:[%s212 + $0x50] sm:$0xff]
        %v233 = vld [vmem:[%s212 + $0x58] sm:$0xff]
        %v234 = vld [vmem:[%s212 + $0x60] sm:$0xff]
        %v235 = vld [vmem:[%s212 + $0x68] sm:$0xff]
        %v236 = vld [vmem:[%s212 + $0x70] sm:$0xff]
        %v237 = vld [vmem:[%s212 + $0x78] sm:$0xff]
        %v238 = vld [vmem:[%s218] sm:$0xff]
        %v239 = vld [vmem:[%s218 + $0x8] sm:$0xff]
        %v240 = vld [vmem:[%s218 + $0x10] sm:$0xff]
        %v241 = vld [vmem:[%s218 + $0x18] sm:$0xff]
        %v242 = vld [vmem:[%s218 + $0x20] sm:$0xff]
        %v243 = vld [vmem:[%s218 + $0x28] sm:$0xff]
        %v244 = vld [vmem:[%s218 + $0x30] sm:$0xff]
        %v245 = vld [vmem:[%s218 + $0x38] sm:$0xff]
        %v246 = vld [vmem:[%s218 + $0x40] sm:$0xff]
        %v247 = vld [vmem:[%s218 + $0x48] sm:$0xff]
        %v248 = vld [vmem:[%s218 + $0x50] sm:$0xff]
        %v249 = vld [vmem:[%s218 + $0x58] sm:$0xff]
        %v250 = vld [vmem:[%s218 + $0x60] sm:$0xff]
        %v251 = vld [vmem:[%s218 + $0x68] sm:$0xff]
        %v252 = vld [vmem:[%s218 + $0x70] sm:$0xff]
        %v253 = vld [vmem:[%s218 + $0x78] sm:$0xff]
        %v254 = vlaneseq
        %v255 = vand.u32 %v254, 127
        %256 = vset.pattern.permute.xlu0 0
        %257 = vperm.xlu0 %256, %v238
        %v258 = vpop.permute.xlu0 %257
        %259 = vset.pattern.permute.xlu0 0
        %260 = vperm.xlu0 %259, %v239
        %v261 = vpop.permute.xlu0 %260
        %262 = vset.pattern.permute.xlu0 0
        %263 = vperm.xlu0 %262, %v240
        %v264 = vpop.permute.xlu0 %263
        %265 = vset.pattern.permute.xlu0 0
        %266 = vperm.xlu0 %265, %v241
        %v267 = vpop.permute.xlu0 %266
        %268 = vset.pattern.permute.xlu0 0
        %269 = vperm.xlu0 %268, %v242
        %v270 = vpop.permute.xlu0 %269
        %271 = vset.pattern.permute.xlu0 0
        %272 = vperm.xlu0 %271, %v243
        %v273 = vpop.permute.xlu0 %272
        %274 = vset.pattern.permute.xlu0 0
        %275 = vperm.xlu0 %274, %v244
        %v276 = vpop.permute.xlu0 %275
        %277 = vset.pattern.permute.xlu0 0
        %278 = vperm.xlu0 %277, %v245
        %v279 = vpop.permute.xlu0 %278
        %280 = vset.pattern.permute.xlu0 0
        %281 = vperm.xlu0 %280, %v246
        %v282 = vpop.permute.xlu0 %281
        %283 = vset.pattern.permute.xlu0 0
        %284 = vperm.xlu0 %283, %v247
        %v285 = vpop.permute.xlu0 %284
        %286 = vset.pattern.permute.xlu0 0
        %287 = vperm.xlu0 %286, %v248
        %v288 = vpop.permute.xlu0 %287
        %289 = vset.pattern.permute.xlu0 0
        %290 = vperm.xlu0 %289, %v249
        %v291 = vpop.permute.xlu0 %290
        %292 = vset.pattern.permute.xlu0 0
        %293 = vperm.xlu0 %292, %v250
        %v294 = vpop.permute.xlu0 %293
        %295 = vset.pattern.permute.xlu0 0
        %296 = vperm.xlu0 %295, %v251
        %v297 = vpop.permute.xlu0 %296
        %298 = vset.pattern.permute.xlu0 0
        %299 = vperm.xlu0 %298, %v252
        %v300 = vpop.permute.xlu0 %299
        %301 = vset.pattern.permute.xlu0 0
        %302 = vperm.xlu0 %301, %v253
        %v303 = vpop.permute.xlu0 %302
        %vm304 = vcmp.eq.s32.totalorder %v258, %v255
        %vm305 = vcmp.eq.s32.totalorder %v261, %v255
        %vm306 = vcmp.eq.s32.totalorder %v264, %v255
        %vm307 = vcmp.eq.s32.totalorder %v267, %v255
        %vm308 = vcmp.eq.s32.totalorder %v270, %v255
        %vm309 = vcmp.eq.s32.totalorder %v273, %v255
        %vm310 = vcmp.eq.s32.totalorder %v276, %v255
        %vm311 = vcmp.eq.s32.totalorder %v279, %v255
        %vm312 = vcmp.eq.s32.totalorder %v282, %v255
        %vm313 = vcmp.eq.s32.totalorder %v285, %v255
        %vm314 = vcmp.eq.s32.totalorder %v288, %v255
        %vm315 = vcmp.eq.s32.totalorder %v291, %v255
        %vm316 = vcmp.eq.s32.totalorder %v294, %v255
        %vm317 = vcmp.eq.s32.totalorder %v297, %v255
        %vm318 = vcmp.eq.s32.totalorder %v300, %v255
        %vm319 = vcmp.eq.s32.totalorder %v303, %v255
        %v320 = vsel %vm304, 1, 0
        %v321 = vsel %vm305, 1, 0
        %v322 = vsel %vm306, 1, 0
        %v323 = vsel %vm307, 1, 0
        %v324 = vsel %vm308, 1, 0
        %v325 = vsel %vm309, 1, 0
        %v326 = vsel %vm310, 1, 0
        %v327 = vsel %vm311, 1, 0
        %v328 = vsel %vm312, 1, 0
        %v329 = vsel %vm313, 1, 0
        %v330 = vsel %vm314, 1, 0
        %v331 = vsel %vm315, 1, 0
        %v332 = vsel %vm316, 1, 0
        %v333 = vsel %vm317, 1, 0
        %v334 = vsel %vm318, 1, 0
        %v335 = vsel %vm319, 1, 0
        %v336 = vcvt.s32.f32 %v320
        %v337 = vcvt.s32.f32 %v321
        %v338 = vcvt.s32.f32 %v322
        %v339 = vcvt.s32.f32 %v323
        %v340 = vcvt.s32.f32 %v324
        %v341 = vcvt.s32.f32 %v325
        %v342 = vcvt.s32.f32 %v326
        %v343 = vcvt.s32.f32 %v327
        %v344 = vcvt.s32.f32 %v328
        %v345 = vcvt.s32.f32 %v329
        %v346 = vcvt.s32.f32 %v330
        %v347 = vcvt.s32.f32 %v331
        %v348 = vcvt.s32.f32 %v332
        %v349 = vcvt.s32.f32 %v333
        %v350 = vcvt.s32.f32 %v334
        %v351 = vcvt.s32.f32 %v335
        %v352 = vadd.f32 %v336, 0.0
        %v353 = vadd.f32 %v337, 0.0
        %v354 = vadd.f32 %v338, 0.0
        %v355 = vadd.f32 %v339, 0.0
        %v356 = vadd.f32 %v340, 0.0
        %v357 = vadd.f32 %v341, 0.0
        %v358 = vadd.f32 %v342, 0.0
        %v359 = vadd.f32 %v343, 0.0
        %v360 = vadd.f32 %v344, 0.0
        %v361 = vadd.f32 %v345, 0.0
        %v362 = vadd.f32 %v346, 0.0
        %v363 = vadd.f32 %v347, 0.0
        %v364 = vadd.f32 %v348, 0.0
        %v365 = vadd.f32 %v349, 0.0
        %v366 = vadd.f32 %v350, 0.0
        %v367 = vadd.f32 %v351, 0.0
        %368 = vset.pattern.permute.xlu0 1
        %369 = vperm.xlu0 %368, %v238
        %v370 = vpop.permute.xlu0 %369
        %371 = vset.pattern.permute.xlu0 1
        %372 = vperm.xlu0 %371, %v239
        %v373 = vpop.permute.xlu0 %372
        %374 = vset.pattern.permute.xlu0 1
        %375 = vperm.xlu0 %374, %v240
        %v376 = vpop.permute.xlu0 %375
        %377 = vset.pattern.permute.xlu0 1
        %378 = vperm.xlu0 %377, %v241
        %v379 = vpop.permute.xlu0 %378
        %380 = vset.pattern.permute.xlu0 1
        %381 = vperm.xlu0 %380, %v242
        %v382 = vpop.permute.xlu0 %381
        %383 = vset.pattern.permute.xlu0 1
        %384 = vperm.xlu0 %383, %v243
        %v385 = vpop.permute.xlu0 %384
        %386 = vset.pattern.permute.xlu0 1
        %387 = vperm.xlu0 %386, %v244
        %v388 = vpop.permute.xlu0 %387
        %389 = vset.pattern.permute.xlu0 1
        %390 = vperm.xlu0 %389, %v245
        %v391 = vpop.permute.xlu0 %390
        %392 = vset.pattern.permute.xlu0 1
        %393 = vperm.xlu0 %392, %v246
        %v394 = vpop.permute.xlu0 %393
        %395 = vset.pattern.permute.xlu0 1
        %396 = vperm.xlu0 %395, %v247
        %v397 = vpop.permute.xlu0 %396
        %398 = vset.pattern.permute.xlu0 1
        %399 = vperm.xlu0 %398, %v248
        %v400 = vpop.permute.xlu0 %399
        %401 = vset.pattern.permute.xlu0 1
        %402 = vperm.xlu0 %401, %v249
        %v403 = vpop.permute.xlu0 %402
        %404 = vset.pattern.permute.xlu0 1
        %405 = vperm.xlu0 %404, %v250
        %v406 = vpop.permute.xlu0 %405
        %407 = vset.pattern.permute.xlu0 1
        %408 = vperm.xlu0 %407, %v251
        %v409 = vpop.permute.xlu0 %408
        %410 = vset.pattern.permute.xlu0 1
        %411 = vperm.xlu0 %410, %v252
        %v412 = vpop.permute.xlu0 %411
        %413 = vset.pattern.permute.xlu0 1
        %414 = vperm.xlu0 %413, %v253
        %v415 = vpop.permute.xlu0 %414
        %vm416 = vcmp.eq.s32.totalorder %v370, %v255
        %vm417 = vcmp.eq.s32.totalorder %v373, %v255
        %vm418 = vcmp.eq.s32.totalorder %v376, %v255
        %vm419 = vcmp.eq.s32.totalorder %v379, %v255
        %vm420 = vcmp.eq.s32.totalorder %v382, %v255
        %vm421 = vcmp.eq.s32.totalorder %v385, %v255
        %vm422 = vcmp.eq.s32.totalorder %v388, %v255
        %vm423 = vcmp.eq.s32.totalorder %v391, %v255
        %vm424 = vcmp.eq.s32.totalorder %v394, %v255
        %vm425 = vcmp.eq.s32.totalorder %v397, %v255
        %vm426 = vcmp.eq.s32.totalorder %v400, %v255
        %vm427 = vcmp.eq.s32.totalorder %v403, %v255
        %vm428 = vcmp.eq.s32.totalorder %v406, %v255
        %vm429 = vcmp.eq.s32.totalorder %v409, %v255
        %vm430 = vcmp.eq.s32.totalorder %v412, %v255
        %vm431 = vcmp.eq.s32.totalorder %v415, %v255
        %v432 = vsel %vm416, 1, 0
        %v433 = vsel %vm417, 1, 0
        %v434 = vsel %vm418, 1, 0
        %v435 = vsel %vm419, 1, 0
        %v436 = vsel %vm420, 1, 0
        %v437 = vsel %vm421, 1, 0
        %v438 = vsel %vm422, 1, 0
        %v439 = vsel %vm423, 1, 0
        %v440 = vsel %vm424, 1, 0
        %v441 = vsel %vm425, 1, 0
        %v442 = vsel %vm426, 1, 0
        %v443 = vsel %vm427, 1, 0
        %v444 = vsel %vm428, 1, 0
        %v445 = vsel %vm429, 1, 0
        %v446 = vsel %vm430, 1, 0
        %v447 = vsel %vm431, 1, 0
        %v448 = vcvt.s32.f32 %v432
        %v449 = vcvt.s32.f32 %v433
        %v450 = vcvt.s32.f32 %v434
        %v451 = vcvt.s32.f32 %v435
        %v452 = vcvt.s32.f32 %v436
        %v453 = vcvt.s32.f32 %v437
        %v454 = vcvt.s32.f32 %v438
        %v455 = vcvt.s32.f32 %v439
        %v456 = vcvt.s32.f32 %v440
        %v457 = vcvt.s32.f32 %v441
        %v458 = vcvt.s32.f32 %v442
        %v459 = vcvt.s32.f32 %v443
        %v460 = vcvt.s32.f32 %v444
        %v461 = vcvt.s32.f32 %v445
        %v462 = vcvt.s32.f32 %v446
        %v463 = vcvt.s32.f32 %v447
        %v464 = vadd.f32 %v352, %v448
        %v465 = vadd.f32 %v353, %v449
        %v466 = vadd.f32 %v354, %v450
        %v467 = vadd.f32 %v355, %v451
        %v468 = vadd.f32 %v356, %v452
        %v469 = vadd.f32 %v357, %v453
        %v470 = vadd.f32 %v358, %v454
        %v471 = vadd.f32 %v359, %v455
        %v472 = vadd.f32 %v360, %v456
        %v473 = vadd.f32 %v361, %v457
        %v474 = vadd.f32 %v362, %v458
        %v475 = vadd.f32 %v363, %v459
        %v476 = vadd.f32 %v364, %v460
        %v477 = vadd.f32 %v365, %v461
        %v478 = vadd.f32 %v366, %v462
        %v479 = vadd.f32 %v367, %v463
        %480 = vset.pattern.permute.xlu0 2
        %481 = vperm.xlu0 %480, %v238
        %v482 = vpop.permute.xlu0 %481
        %483 = vset.pattern.permute.xlu0 2
        %484 = vperm.xlu0 %483, %v239
        %v485 = vpop.permute.xlu0 %484
        %486 = vset.pattern.permute.xlu0 2
        %487 = vperm.xlu0 %486, %v240
        %v488 = vpop.permute.xlu0 %487
        %489 = vset.pattern.permute.xlu0 2
        %490 = vperm.xlu0 %489, %v241
        %v491 = vpop.permute.xlu0 %490
        %492 = vset.pattern.permute.xlu0 2
        %493 = vperm.xlu0 %492, %v242
        %v494 = vpop.permute.xlu0 %493
        %495 = vset.pattern.permute.xlu0 2
        %496 = vperm.xlu0 %495, %v243
        %v497 = vpop.permute.xlu0 %496
        %498 = vset.pattern.permute.xlu0 2
        %499 = vperm.xlu0 %498, %v244
        %v500 = vpop.permute.xlu0 %499
        %501 = vset.pattern.permute.xlu0 2
        %502 = vperm.xlu0 %501, %v245
        %v503 = vpop.permute.xlu0 %502
        %504 = vset.pattern.permute.xlu0 2
        %505 = vperm.xlu0 %504, %v246
        %v506 = vpop.permute.xlu0 %505
        %507 = vset.pattern.permute.xlu0 2
        %508 = vperm.xlu0 %507, %v247
        %v509 = vpop.permute.xlu0 %508
        %510 = vset.pattern.permute.xlu0 2
        %511 = vperm.xlu0 %510, %v248
        %v512 = vpop.permute.xlu0 %511
        %513 = vset.pattern.permute.xlu0 2
        %514 = vperm.xlu0 %513, %v249
        %v515 = vpop.permute.xlu0 %514
        %516 = vset.pattern.permute.xlu0 2
        %517 = vperm.xlu0 %516, %v250
        %v518 = vpop.permute.xlu0 %517
        %519 = vset.pattern.permute.xlu0 2
        %520 = vperm.xlu0 %519, %v251
        %v521 = vpop.permute.xlu0 %520
        %522 = vset.pattern.permute.xlu0 2
        %523 = vperm.xlu0 %522, %v252
        %v524 = vpop.permute.xlu0 %523
        %525 = vset.pattern.permute.xlu0 2
        %526 = vperm.xlu0 %525, %v253
        %v527 = vpop.permute.xlu0 %526
        %vm528 = vcmp.eq.s32.totalorder %v482, %v255
        %vm529 = vcmp.eq.s32.totalorder %v485, %v255
        %vm530 = vcmp.eq.s32.totalorder %v488, %v255
        %vm531 = vcmp.eq.s32.totalorder %v491, %v255
        %vm532 = vcmp.eq.s32.totalorder %v494, %v255
        %vm533 = vcmp.eq.s32.totalorder %v497, %v255
        %vm534 = vcmp.eq.s32.totalorder %v500, %v255
        %vm535 = vcmp.eq.s32.totalorder %v503, %v255
        %vm536 = vcmp.eq.s32.totalorder %v506, %v255
        %vm537 = vcmp.eq.s32.totalorder %v509, %v255
        %vm538 = vcmp.eq.s32.totalorder %v512, %v255
        %vm539 = vcmp.eq.s32.totalorder %v515, %v255
        %vm540 = vcmp.eq.s32.totalorder %v518, %v255
        %vm541 = vcmp.eq.s32.totalorder %v521, %v255
        %vm542 = vcmp.eq.s32.totalorder %v524, %v255
        %vm543 = vcmp.eq.s32.totalorder %v527, %v255
        %v544 = vsel %vm528, 1, 0
        %v545 = vsel %vm529, 1, 0
        %v546 = vsel %vm530, 1, 0
        %v547 = vsel %vm531, 1, 0
        %v548 = vsel %vm532, 1, 0
        %v549 = vsel %vm533, 1, 0
        %v550 = vsel %vm534, 1, 0
        %v551 = vsel %vm535, 1, 0
        %v552 = vsel %vm536, 1, 0
        %v553 = vsel %vm537, 1, 0
        %v554 = vsel %vm538, 1, 0
        %v555 = vsel %vm539, 1, 0
        %v556 = vsel %vm540, 1, 0
        %v557 = vsel %vm541, 1, 0
        %v558 = vsel %vm542, 1, 0
        %v559 = vsel %vm543, 1, 0
        %v560 = vcvt.s32.f32 %v544
        %v561 = vcvt.s32.f32 %v545
        %v562 = vcvt.s32.f32 %v546
        %v563 = vcvt.s32.f32 %v547
        %v564 = vcvt.s32.f32 %v548
        %v565 = vcvt.s32.f32 %v549
        %v566 = vcvt.s32.f32 %v550
        %v567 = vcvt.s32.f32 %v551
        %v568 = vcvt.s32.f32 %v552
        %v569 = vcvt.s32.f32 %v553
        %v570 = vcvt.s32.f32 %v554
        %v571 = vcvt.s32.f32 %v555
        %v572 = vcvt.s32.f32 %v556
        %v573 = vcvt.s32.f32 %v557
        %v574 = vcvt.s32.f32 %v558
        %v575 = vcvt.s32.f32 %v559
        %v576 = vadd.f32 %v464, %v560
        %v577 = vadd.f32 %v465, %v561
        %v578 = vadd.f32 %v466, %v562
        %v579 = vadd.f32 %v467, %v563
        %v580 = vadd.f32 %v468, %v564
        %v581 = vadd.f32 %v469, %v565
        %v582 = vadd.f32 %v470, %v566
        %v583 = vadd.f32 %v471, %v567
        %v584 = vadd.f32 %v472, %v568
        %v585 = vadd.f32 %v473, %v569
        %v586 = vadd.f32 %v474, %v570
        %v587 = vadd.f32 %v475, %v571
        %v588 = vadd.f32 %v476, %v572
        %v589 = vadd.f32 %v477, %v573
        %v590 = vadd.f32 %v478, %v574
        %v591 = vadd.f32 %v479, %v575
        %592 = vset.pattern.permute.xlu0 3
        %593 = vperm.xlu0 %592, %v238
        %v594 = vpop.permute.xlu0 %593
        %595 = vset.pattern.permute.xlu0 3
        %596 = vperm.xlu0 %595, %v239
        %v597 = vpop.permute.xlu0 %596
        %598 = vset.pattern.permute.xlu0 3
        %599 = vperm.xlu0 %598, %v240
        %v600 = vpop.permute.xlu0 %599
        %601 = vset.pattern.permute.xlu0 3
        %602 = vperm.xlu0 %601, %v241
        %v603 = vpop.permute.xlu0 %602
        %604 = vset.pattern.permute.xlu0 3
        %605 = vperm.xlu0 %604, %v242
        %v606 = vpop.permute.xlu0 %605
        %607 = vset.pattern.permute.xlu0 3
        %608 = vperm.xlu0 %607, %v243
        %v609 = vpop.permute.xlu0 %608
        %610 = vset.pattern.permute.xlu0 3
        %611 = vperm.xlu0 %610, %v244
        %v612 = vpop.permute.xlu0 %611
        %613 = vset.pattern.permute.xlu0 3
        %614 = vperm.xlu0 %613, %v245
        %v615 = vpop.permute.xlu0 %614
        %616 = vset.pattern.permute.xlu0 3
        %617 = vperm.xlu0 %616, %v246
        %v618 = vpop.permute.xlu0 %617
        %619 = vset.pattern.permute.xlu0 3
        %620 = vperm.xlu0 %619, %v247
        %v621 = vpop.permute.xlu0 %620
        %622 = vset.pattern.permute.xlu0 3
        %623 = vperm.xlu0 %622, %v248
        %v624 = vpop.permute.xlu0 %623
        %625 = vset.pattern.permute.xlu0 3
        %626 = vperm.xlu0 %625, %v249
        %v627 = vpop.permute.xlu0 %626
        %628 = vset.pattern.permute.xlu0 3
        %629 = vperm.xlu0 %628, %v250
        %v630 = vpop.permute.xlu0 %629
        %631 = vset.pattern.permute.xlu0 3
        %632 = vperm.xlu0 %631, %v251
        %v633 = vpop.permute.xlu0 %632
        %634 = vset.pattern.permute.xlu0 3
        %635 = vperm.xlu0 %634, %v252
        %v636 = vpop.permute.xlu0 %635
        %637 = vset.pattern.permute.xlu0 3
        %638 = vperm.xlu0 %637, %v253
        %v639 = vpop.permute.xlu0 %638
        %vm640 = vcmp.eq.s32.totalorder %v594, %v255
        %vm641 = vcmp.eq.s32.totalorder %v597, %v255
        %vm642 = vcmp.eq.s32.totalorder %v600, %v255
        %vm643 = vcmp.eq.s32.totalorder %v603, %v255
        %vm644 = vcmp.eq.s32.totalorder %v606, %v255
        %vm645 = vcmp.eq.s32.totalorder %v609, %v255
        %vm646 = vcmp.eq.s32.totalorder %v612, %v255
        %vm647 = vcmp.eq.s32.totalorder %v615, %v255
        %vm648 = vcmp.eq.s32.totalorder %v618, %v255
        %vm649 = vcmp.eq.s32.totalorder %v621, %v255
        %vm650 = vcmp.eq.s32.totalorder %v624, %v255
        %vm651 = vcmp.eq.s32.totalorder %v627, %v255
        %vm652 = vcmp.eq.s32.totalorder %v630, %v255
        %vm653 = vcmp.eq.s32.totalorder %v633, %v255
        %vm654 = vcmp.eq.s32.totalorder %v636, %v255
        %vm655 = vcmp.eq.s32.totalorder %v639, %v255
        %v656 = vsel %vm640, 1, 0
        %v657 = vsel %vm641, 1, 0
        %v658 = vsel %vm642, 1, 0
        %v659 = vsel %vm643, 1, 0
        %v660 = vsel %vm644, 1, 0
        %v661 = vsel %vm645, 1, 0
        %v662 = vsel %vm646, 1, 0
        %v663 = vsel %vm647, 1, 0
        %v664 = vsel %vm648, 1, 0
        %v665 = vsel %vm649, 1, 0
        %v666 = vsel %vm650, 1, 0
        %v667 = vsel %vm651, 1, 0
        %v668 = vsel %vm652, 1, 0
        %v669 = vsel %vm653, 1, 0
        %v670 = vsel %vm654, 1, 0
        %v671 = vsel %vm655, 1, 0
        %v672 = vcvt.s32.f32 %v656
        %v673 = vcvt.s32.f32 %v657
        %v674 = vcvt.s32.f32 %v658
        %v675 = vcvt.s32.f32 %v659
        %v676 = vcvt.s32.f32 %v660
        %v677 = vcvt.s32.f32 %v661
        %v678 = vcvt.s32.f32 %v662
        %v679 = vcvt.s32.f32 %v663
        %v680 = vcvt.s32.f32 %v664
        %v681 = vcvt.s32.f32 %v665
        %v682 = vcvt.s32.f32 %v666
        %v683 = vcvt.s32.f32 %v667
        %v684 = vcvt.s32.f32 %v668
        %v685 = vcvt.s32.f32 %v669
        %v686 = vcvt.s32.f32 %v670
        %v687 = vcvt.s32.f32 %v671
        %v688 = vadd.f32 %v576, %v672
        %v689 = vadd.f32 %v577, %v673
        %v690 = vadd.f32 %v578, %v674
        %v691 = vadd.f32 %v579, %v675
        %v692 = vadd.f32 %v580, %v676
        %v693 = vadd.f32 %v581, %v677
        %v694 = vadd.f32 %v582, %v678
        %v695 = vadd.f32 %v583, %v679
        %v696 = vadd.f32 %v584, %v680
        %v697 = vadd.f32 %v585, %v681
        %v698 = vadd.f32 %v586, %v682
        %v699 = vadd.f32 %v587, %v683
        %v700 = vadd.f32 %v588, %v684
        %v701 = vadd.f32 %v589, %v685
        %v702 = vadd.f32 %v590, %v686
        %v703 = vadd.f32 %v591, %v687
        %v704 = vpack.c.bf16 %v689, %v688
        %v705 = vpack.c.bf16 %v691, %v690
        %v706 = vpack.c.bf16 %v693, %v692
        %v707 = vpack.c.bf16 %v695, %v694
        %v708 = vpack.c.bf16 %v697, %v696
        %v709 = vpack.c.bf16 %v699, %v698
        %v710 = vpack.c.bf16 %v701, %v700
        %v711 = vpack.c.bf16 %v703, %v702
        %v712 = vld [vmem:[%s2] sm:$0xff]
        %v713 = vld [vmem:[%s2 + $0x8] sm:$0xff]
        %v714 = vld [vmem:[%s3] sm:$0xf]
        %v715 = vld [vmem:[%s3 + $0x4] sm:$0xf]
        %v716 = vld [vmem:[%s3 + $0x8] sm:$0xf]
        %v717 = vld [vmem:[%s3 + $0xc] sm:$0xf]
        %v722 = vunpack.c.l.b16 %v714
        %v723 = vunpack.c.l.b16 %v715
        %v724 = vunpack.c.l.b16 %v716
        %v725 = vunpack.c.l.b16 %v717
        %v726 = vpack.c.b16 %v723, %v722
        %v727 = vpack.c.b16 %v725, %v724
        %vm730 = vcmask 261120
        %v732 = vsel %vm730, %v704, 0
        %v735 = vsel %vm730, %v705, 0
        %v738 = vsel %vm730, %v706, 0
        %v741 = vsel %vm730, %v707, 0
        %v744 = vsel %vm730, %v708, 0
        %v747 = vsel %vm730, %v709, 0
        %v750 = vsel %vm730, %v710, 0
        %v753 = vsel %vm730, %v711, 0
        %755 = vmatpush.bf16.msra.mxu0 0
        %756 = vmatpush.bf16.msra.mxu0 0
        %757 = vmatpush.bf16.msra.mxu0 0
        %758 = vmatpush.bf16.msra.mxu0 0
        %759 = vmatpush.bf16.msra.mxu0 0
        %760 = vmatpush.bf16.msra.mxu0 0
        %761 = vmatpush.bf16.msra.mxu0 %v727
        %762 = vmatpush.bf16.msra.mxu0 %v726
        %763 = vmatmul.bf16.gmra.mxu0 %v732
        %v764 = vpop.f32.mrf.mxu0
        %v765 = vadd.f32 0.0, %v764
        %v766 = vpop.f32.mrf.mxu0
        %v767 = vadd.f32 0.0, %v766
        %768 = vmatmul.bf16.gmra.mxu0 %v735
        %v769 = vpop.f32.mrf.mxu0
        %v770 = vadd.f32 0.0, %v769
        %v771 = vpop.f32.mrf.mxu0
        %v772 = vadd.f32 0.0, %v771
        %773 = vmatmul.bf16.gmra.mxu0 %v738
        %v774 = vpop.f32.mrf.mxu0
        %v775 = vadd.f32 0.0, %v774
        %v776 = vpop.f32.mrf.mxu0
        %v777 = vadd.f32 0.0, %v776
        %778 = vmatmul.bf16.gmra.mxu0 %v741
        %v779 = vpop.f32.mrf.mxu0
        %v780 = vadd.f32 0.0, %v779
        %v781 = vpop.f32.mrf.mxu0
        %v782 = vadd.f32 0.0, %v781
        %783 = vmatmul.bf16.gmra.mxu0 %v744
        %v784 = vpop.f32.mrf.mxu0
        %v785 = vadd.f32 0.0, %v784
        %v786 = vpop.f32.mrf.mxu0
        %v787 = vadd.f32 0.0, %v786
        %788 = vmatmul.bf16.gmra.mxu0 %v747
        %v789 = vpop.f32.mrf.mxu0
        %v790 = vadd.f32 0.0, %v789
        %v791 = vpop.f32.mrf.mxu0
        %v792 = vadd.f32 0.0, %v791
        %793 = vmatmul.bf16.gmra.mxu0 %v750
        %v794 = vpop.f32.mrf.mxu0
        %v795 = vadd.f32 0.0, %v794
        %v796 = vpop.f32.mrf.mxu0
        %v797 = vadd.f32 0.0, %v796
        %798 = vmatmul.bf16.gmra.mxu0 %v753
        %v799 = vpop.f32.mrf.mxu0
        %v800 = vadd.f32 0.0, %v799
        %v801 = vpop.f32.mrf.mxu0
        %v802 = vadd.f32 0.0, %v801
        %803 = vdwg.mxu0
        %vm804 = vcmask 130048
        %v806 = vsel %vm804, %v222, 0
        %v809 = vsel %vm804, %v223, 0
        %v812 = vsel %vm804, %v224, 0
        %v815 = vsel %vm804, %v225, 0
        %v818 = vsel %vm804, %v226, 0
        %v821 = vsel %vm804, %v227, 0
        %v824 = vsel %vm804, %v228, 0
        %v827 = vsel %vm804, %v229, 0
        %v830 = vsel %vm804, %v230, 0
        %v833 = vsel %vm804, %v231, 0
        %v836 = vsel %vm804, %v232, 0
        %v839 = vsel %vm804, %v233, 0
        %v842 = vsel %vm804, %v234, 0
        %v845 = vsel %vm804, %v235, 0
        %v848 = vsel %vm804, %v236, 0
        %v851 = vsel %vm804, %v237, 0
        %853 = vmatpush.msra.mxu0 0.0
        %854 = vmatpush.msra.mxu0 0.0
        %855 = vmatpush.msra.mxu0 0.0
        %856 = vmatpush.msra.mxu0 0.0
        %857 = vmatpush.msra.mxu0 0.0
        %858 = vmatpush.msra.mxu0 0.0
        %859 = vmatpush.msra.mxu0 0.0
        %860 = vmatpush.msra.mxu0 0.0
        %861 = vmatpush.msra.mxu0 0.0
        %862 = vmatpush.msra.mxu0 0.0
        %863 = vmatpush.msra.mxu0 0.0
        %864 = vmatpush.msra.mxu0 0.0
        %865 = vmatpush.msra.mxu0 0.0
        %866 = vmatpush.msra.mxu0 0.0
        %867 = vmatpush.msra.mxu0 %v713
        %868 = vmatpush.msra.mxu0 %v712
        %869 = vmatmul.f32.gmra.mxu0 %v806
        %v870 = vpop.f32.mrf.mxu0
        %v871 = vadd.f32 %v765, %v870
        %872 = vmatmul.f32.gmra.mxu0 %v809
        %v873 = vpop.f32.mrf.mxu0
        %v874 = vadd.f32 %v767, %v873
        %875 = vmatmul.f32.gmra.mxu0 %v812
        %v876 = vpop.f32.mrf.mxu0
        %v877 = vadd.f32 %v770, %v876
        %878 = vmatmul.f32.gmra.mxu0 %v815
        %v879 = vpop.f32.mrf.mxu0
        %v880 = vadd.f32 %v772, %v879
        %881 = vmatmul.f32.gmra.mxu0 %v818
        %v882 = vpop.f32.mrf.mxu0
        %v883 = vadd.f32 %v775, %v882
        %884 = vmatmul.f32.gmra.mxu0 %v821
        %v885 = vpop.f32.mrf.mxu0
        %v886 = vadd.f32 %v777, %v885
        %887 = vmatmul.f32.gmra.mxu0 %v824
        %v888 = vpop.f32.mrf.mxu0
        %v889 = vadd.f32 %v780, %v888
        %890 = vmatmul.f32.gmra.mxu0 %v827
        %v891 = vpop.f32.mrf.mxu0
        %v892 = vadd.f32 %v782, %v891
        %893 = vmatmul.f32.gmra.mxu0 %v830
        %v894 = vpop.f32.mrf.mxu0
        %v895 = vadd.f32 %v785, %v894
        %896 = vmatmul.f32.gmra.mxu0 %v833
        %v897 = vpop.f32.mrf.mxu0
        %v898 = vadd.f32 %v787, %v897
        %899 = vmatmul.f32.gmra.mxu0 %v836
        %v900 = vpop.f32.mrf.mxu0
        %v901 = vadd.f32 %v790, %v900
        %902 = vmatmul.f32.gmra.mxu0 %v839
        %v903 = vpop.f32.mrf.mxu0
        %v904 = vadd.f32 %v792, %v903
        %905 = vmatmul.f32.gmra.mxu0 %v842
        %v906 = vpop.f32.mrf.mxu0
        %v907 = vadd.f32 %v795, %v906
        %908 = vmatmul.f32.gmra.mxu0 %v845
        %v909 = vpop.f32.mrf.mxu0
        %v910 = vadd.f32 %v797, %v909
        %911 = vmatmul.f32.gmra.mxu0 %v848
        %v912 = vpop.f32.mrf.mxu0
        %v913 = vadd.f32 %v800, %v912
        %914 = vmatmul.f32.gmra.mxu0 %v851
        %v915 = vpop.f32.mrf.mxu0
        %v916 = vadd.f32 %v802, %v915
        %917 = vdwg.mxu0
        %918 = vst [vmem:[%s207] sm:$0xff] %v871
        %919 = vst [vmem:[%s207 + $0x8] sm:$0xff] %v874
        %920 = vst [vmem:[%s207 + $0x10] sm:$0xff] %v877
        %921 = vst [vmem:[%s207 + $0x18] sm:$0xff] %v880
        %922 = vst [vmem:[%s207 + $0x20] sm:$0xff] %v883
        %923 = vst [vmem:[%s207 + $0x28] sm:$0xff] %v886
        %924 = vst [vmem:[%s207 + $0x30] sm:$0xff] %v889
        %925 = vst [vmem:[%s207 + $0x38] sm:$0xff] %v892
        %926 = vst [vmem:[%s207 + $0x40] sm:$0xff] %v895
        %927 = vst [vmem:[%s207 + $0x48] sm:$0xff] %v898
        %928 = vst [vmem:[%s207 + $0x50] sm:$0xff] %v901
        %929 = vst [vmem:[%s207 + $0x58] sm:$0xff] %v904
        %930 = vst [vmem:[%s207 + $0x60] sm:$0xff] %v907
        %931 = vst [vmem:[%s207 + $0x68] sm:$0xff] %v910
        %932 = vst [vmem:[%s207 + $0x70] sm:$0xff] %v913
        %933 = vst [vmem:[%s207 + $0x78] sm:$0xff] %v916
        %s934 = sand.u32 %s120, 1
        %s935 = scalar_lea.sflag [#allocation3], %s934
        %s936 = sand.u32 %s120, 1
        %s937 = smul.addr %s936, 128
        %s938 = scalar_lea.vmem [#allocation2], %s937
        // Predicated region
        $region37: #{tpu_custom_call.1} parent=35 // pred_check
          %p939 = pneg %p130
        $region38: #{tpu_custom_call.1} parent=35 // pred_check_branch
          %941 = sbr.rel (%p939) target = $region40
        $region39: #{tpu_custom_call.1} parent=35 // pred_region
          %s942 = smul.u32 16, %s18
          %944 = vsyncadd %s935, 0
          %s945 = smul.addr %s942, 8
          %s946 = scalar_lea.hbm %s4, %s945
          %s947 = sshll.u32 %s938, 4
          %s948 = int_to_ptr.vmem [resolvable:$true] %s947
          %s949 = sshll.u32 %s946, 4
          %s950 = int_to_ptr.hbm [resolvable:$true] %s949
          %955 = dma.vmem_to_hbm [thread:$0]  %s948, 2048, %s950, %s935, 128, 128, 8
        $region40: #{tpu_custom_call.1} parent=35 // pred_fallthru
          _
      $region36: #{tpu_custom_call.1} parent=5 // pred_fallthru
        _
      %p956 = scmp.le.s32.totalorder 2, %s13
      // Predicated region
      $region41: #{tpu_custom_call.1} parent=5 // pred_check
        %p957 = pneg %p956
      $region42: #{tpu_custom_call.1} parent=5 // pred_check_branch
        %959 = sbr.rel (%p957) target = $region44
      $region43: #{tpu_custom_call.1} parent=5 // pred_region
        %s960 = ssub.s32 %s13, 2
        // Predicated region
        $region45: #{tpu_custom_call.1} parent=43 // pred_check
          %p961 = pneg %p136
        $region46: #{tpu_custom_call.1} parent=43 // pred_check_branch
          %963 = sbr.rel (%p961) target = $region48
        $region47: #{tpu_custom_call.1} parent=43 // pred_region
          %s964 = sand.u32 %s121, 1
          %s965 = scalar_lea.sflag [#allocation3], %s964
          %s966 = sand.u32 %s121, 1
          %s967 = smul.addr %s966, 128
          %s968 = scalar_lea.vmem [#allocation2], %s967
          %970 = dma.done %s965, 2048
        $region48: #{tpu_custom_call.1} parent=43 // pred_fallthru
          _
      $region44: #{tpu_custom_call.1} parent=5 // pred_fallthru
        _
    $region6: #{tpu_custom_call.1} parent=1 // loop_footer
      %s17 = sadd.s32 1, %s13
    $region7: #{tpu_custom_call.1} parent=1 // loop_footer_branch
      %12 = sbr.rel target = $region3
    $region8: #{tpu_custom_call.1} parent=1 // loop_exit
      _
    %971 = vsyncpa [#allocation3], 1
    %s972 = scalar_lea.sflag [#allocation3], 1
    %973 = vsyncpa %s972, 1

</llo_original>
